<compile_context>
chip_gen: v5e
topology: v5e:2x2
jax: 0.10.0
libtpu: 0.0.40
codegen_flags: <defaults>
</compile_context>

<pallas_src>
import functools

import jax
import jax.numpy as jnp
from jax.experimental import pallas as pl
from jax.experimental.pallas import tpu as pltpu


# ----------------------------------------------------------------------------
# Kernel
# ----------------------------------------------------------------------------
def image_embedding_kernel(patches_ref, w_emb_ref, b_emb_ref,
                           w_pool_ref, b_pool_ref, out_ref):
    # patches_ref: [TB, P, Dp]  bf16   (one batch tile of patch rows)
    # w_emb_ref  : [Dp, H] bf16,  b_emb_ref : [1, H] f32
    # w_pool_ref : [H, H]  bf16,  b_pool_ref: [1, H] f32
    # out_ref    : [TB, H] f32
    patches = patches_ref[...].astype(jnp.float32)            # [TB, P, Dp]

    # 1) pool BEFORE the embedding matmul (linearity) -> [TB, Dp]
    pooled = jnp.mean(patches, axis=1)

    # 2) patch embedding: bf16 MXU matmul, f32 accumulate, f32 bias
    emb = jnp.dot(pooled.astype(jnp.bfloat16), w_emb_ref[...],
                  preferred_element_type=jnp.float32) + b_emb_ref[...]

    # 3) pooler head: dense + tanh (f32 epilogue)
    pooler = jnp.dot(emb.astype(jnp.bfloat16), w_pool_ref[...],
                     preferred_element_type=jnp.float32) + b_pool_ref[...]
    pooler = jnp.tanh(pooler)

    # 4) L2 normalize along dim=1 (torch.nn.functional.normalize, eps=1e-12).
    #    max(sqrt(sq), 1e-12) == rsqrt(max(sq, 1e-24)) reciprocal; rsqrt rides
    #    the otherwise-idle EUP slot instead of a VPU divide.
    sq = jnp.sum(pooler * pooler, axis=1, keepdims=True)
    inv = jax.lax.rsqrt(jnp.maximum(sq, 1e-24))
    out_ref[...] = pooler * inv


# ----------------------------------------------------------------------------
# Wrapper
# ----------------------------------------------------------------------------
def _round_up(x, m):
    return ((x + m - 1) // m) * m


def _pad_to(x, shape):
    pads = [(0, t - s) for s, t in zip(x.shape, shape)]
    return jnp.pad(x, pads)


def extract_patches(images, patch):
    # images: NCHW [B, C, H, W]  ->  [B, num_patches, C*patch*patch]
    # (row-major over (C, ph, pw), matching a Conv2d patch-embed flatten)
    B, C, H, W = images.shape
    hp, wp = H // patch, W // patch
    x = images.reshape(B, C, hp, patch, wp, patch)
    x = jnp.transpose(x, (0, 2, 4, 1, 3, 5))                  # [B,hp,wp,C,ph,pw]
    return x.reshape(B, hp * wp, C * patch * patch)


def image_embedding_forward(images, params, patch=8):
    patches = extract_patches(images, patch)                  # [B, P, Dp] f32
    B, P, Dp = patches.shape
    H = params["w_pool"].shape[0]

    # Lane-dense padding for the matmul K/N dims and the output width.
    Dp_pad = _round_up(Dp, 128)
    H_pad = _round_up(H, 128)

    # Batch tile: up to 128 rows (MXU-friendly), multiple of 8 (sublanes),
    # shrunk if a double-buffered patch tile would blow the VMEM budget
    # (conservative for v7x's 64 MiB physical / 32 MiB default-scoped VMEM).
    TB = min(128, _round_up(B, 8))
    patch_row_bytes = P * Dp_pad * 2                          # bf16 row
    while TB > 8 and 2 * TB * patch_row_bytes > (8 << 20):
        TB = max(8, ((TB // 2) + 7) // 8 * 8)
    B_pad = _round_up(B, TB)

    # Zero-padding keeps the math exact: padded emb/pooler columns are 0 and
    # tanh(0)=0, so the L2 norm over H_pad equals the norm over H.
    patches_p = _pad_to(patches, (B_pad, P, Dp_pad)).astype(jnp.bfloat16)
    w_emb = _pad_to(params["w_emb"], (Dp_pad, H_pad)).astype(jnp.bfloat16)
    b_emb = _pad_to(params["b_emb"], (1, H_pad)).astype(jnp.float32)
    w_pool = _pad_to(params["w_pool"], (H_pad, H_pad)).astype(jnp.bfloat16)
    b_pool = _pad_to(params["b_pool"], (1, H_pad)).astype(jnp.float32)

    grid = (B_pad // TB,)
    out = pl.pallas_call(
        image_embedding_kernel,
        out_shape=jax.ShapeDtypeStruct((B_pad, H_pad), jnp.float32),
        grid=grid,
        in_specs=[
            # patch tiles stream per grid step (double-buffered by Pallas)
            pl.BlockSpec((TB, P, Dp_pad), lambda i: (i, 0, 0)),
            # weights / biases: constant index_map -> VMEM-resident
            pl.BlockSpec((Dp_pad, H_pad), lambda i: (0, 0)),
            pl.BlockSpec((1, H_pad), lambda i: (0, 0)),
            pl.BlockSpec((H_pad, H_pad), lambda i: (0, 0)),
            pl.BlockSpec((1, H_pad), lambda i: (0, 0)),
        ],
        out_specs=pl.BlockSpec((TB, H_pad), lambda i: (i, 0)),
        compiler_params=pltpu.CompilerParams(
            dimension_semantics=("parallel",),       # megacore on v7x
            vmem_limit_bytes=32 * 1024 * 1024,
        ),
    )(patches_p, w_emb, b_emb, w_pool, b_pool)

    return out[:B, :H]


def reference_forward(images, params, patch=8):
    # Pure-JAX f32 reference (same math as the kernel, no padding / bf16).
    patches = extract_patches(images, patch)
    pooled = jnp.mean(patches, axis=1)
    emb = pooled @ params["w_emb"] + params["b_emb"]
    pooler = jnp.tanh(emb @ params["w_pool"] + params["b_pool"])
    norm = jnp.maximum(jnp.sqrt(jnp.sum(pooler * pooler, axis=1,
                                        keepdims=True)), 1e-12)
    return pooler / norm


def init_params(key, patch_dim, hidden):
    k1, k2, k3, k4 = jax.random.split(key, 4)
    scale_e = 1.0 / jnp.sqrt(jnp.float32(patch_dim))
    scale_p = 1.0 / jnp.sqrt(jnp.float32(hidden))
    return {
        "w_emb": jax.random.normal(k1, (patch_dim, hidden), jnp.float32) * scale_e,
        "b_emb": jax.random.normal(k2, (1, hidden), jnp.float32) * 0.01,
        "w_pool": jax.random.normal(k3, (hidden, hidden), jnp.float32) * scale_p,
        "b_pool": jax.random.normal(k4, (1, hidden), jnp.float32) * 0.01,
    }


if __name__ == "__main__":
    key = jax.random.PRNGKey(0)
    k_img, k_par = jax.random.split(key)

    B, C, H, W = 2, 4, 16, 16
    patch = 8
    hidden = 32
    patch_dim = C * patch * patch

    images = jax.random.normal(k_img, (B, C, H, W), jnp.float32)   # NCHW
    params = init_params(k_par, patch_dim, hidden)

    fwd = jax.jit(functools.partial(image_embedding_forward, patch=patch))
    out = jax.block_until_ready(fwd(images, params))

    assert out.shape == (B, hidden)

    # sanity: rows are unit-norm (f32 normalize epilogue)
    norms = jnp.sqrt(jnp.sum(out * out, axis=1))
    assert bool(jnp.all(jnp.abs(norms - 1.0) < 1e-4)), norms

    # correctness vs pure-JAX f32 reference (loose tol: bf16 MXU inputs)
    ref = reference_forward(images, params, patch=patch)
    assert bool(jnp.max(jnp.abs(out - ref)) < 5e-2), jnp.max(jnp.abs(out - ref))

    print("KERNEL_OK")
</pallas_src>

<mosaic_0001>
module attributes {stable_mosaic.version = 11 : i64} {
  func.func @image_embedding_kernel(%arg0: i32, %arg1: memref<8x4x256xbf16, #tpu.memory_space<vmem>>, %arg2: memref<256x128xbf16, #tpu.memory_space<vmem>>, %arg3: memref<1x128xf32, #tpu.memory_space<vmem>>, %arg4: memref<128x128xbf16, #tpu.memory_space<vmem>>, %arg5: memref<1x128xf32, #tpu.memory_space<vmem>>, %arg6: memref<8x128xf32, #tpu.memory_space<vmem>>) attributes {dimension_semantics = [#tpu.dimension_semantics<parallel>], iteration_bounds = array<i64: 1>, scalar_prefetch = 0 : i64, scratch_operands = 0 : i64, tpu.core_type = #tpu.core_type<tc>, window_params = [{transform_indices = @transform_0, window_bounds = array<i64: 8, 4, 256>}, {pipeline_mode = #tpu.pipeline_mode<synchronous>, transform_indices = @transform_1, window_bounds = array<i64: 256, 128>}, {pipeline_mode = #tpu.pipeline_mode<synchronous>, transform_indices = @transform_2, window_bounds = array<i64: 1, 128>}, {pipeline_mode = #tpu.pipeline_mode<synchronous>, transform_indices = @transform_3, window_bounds = array<i64: 128, 128>}, {pipeline_mode = #tpu.pipeline_mode<synchronous>, transform_indices = @transform_4, window_bounds = array<i64: 1, 128>}, {transform_indices = @transform_5, window_bounds = array<i64: 8, 128>}]} {
    %c0 = arith.constant 0 : index
    %c0_0 = arith.constant 0 : index
    %c0_1 = arith.constant 0 : index
    %0 = vector.load %arg1[%c0, %c0_0, %c0_1] : memref<8x4x256xbf16, #tpu.memory_space<vmem>>, vector<8x4x256xbf16>
    %1 = arith.extf %0 : vector<8x4x256xbf16> to vector<8x4x256xf32>
    %cst = arith.constant dense<0.000000e+00> : vector<8x256xf32>
    %2 = vector.multi_reduction <add>, %1, %cst [1] : vector<8x4x256xf32> to vector<8x256xf32>
    %cst_2 = arith.constant 4.000000e+00 : f32
    %3 = vector.broadcast %cst_2 : f32 to vector<8x256xf32>
    %4 = arith.divf %2, %3 : vector<8x256xf32>
    %5 = arith.truncf %4 : vector<8x256xf32> to vector<8x256xbf16>
    %c0_3 = arith.constant 0 : index
    %c0_4 = arith.constant 0 : index
    %6 = vector.load %arg2[%c0_3, %c0_4] : memref<256x128xbf16, #tpu.memory_space<vmem>>, vector<256x128xbf16>
    %cst_5 = arith.constant dense<0.000000e+00> : vector<8x128xf32>
    %7 = tpu.matmul %5, %6, %cst_5 {dimension_numbers = #tpu.dot_dimension_numbers<[1], [0], [0], [1], [0, 0, 1, 1], [], []>} : vector<8x256xbf16>, vector<256x128xbf16>, vector<8x128xf32> -> vector<8x128xf32>
    %c0_6 = arith.constant 0 : index
    %c0_7 = arith.constant 0 : index
    %8 = vector.load %arg3[%c0_6, %c0_7] : memref<1x128xf32, #tpu.memory_space<vmem>>, vector<1x128xf32>
    %9 = vector.broadcast %8 : vector<1x128xf32> to vector<8x128xf32>
    %10 = arith.addf %7, %9 : vector<8x128xf32>
    %11 = arith.truncf %10 : vector<8x128xf32> to vector<8x128xbf16>
    %c0_8 = arith.constant 0 : index
    %c0_9 = arith.constant 0 : index
    %12 = vector.load %arg4[%c0_8, %c0_9] : memref<128x128xbf16, #tpu.memory_space<vmem>>, vector<128x128xbf16>
    %cst_10 = arith.constant dense<0.000000e+00> : vector<8x128xf32>
    %13 = tpu.matmul %11, %12, %cst_10 {dimension_numbers = #tpu.dot_dimension_numbers<[1], [0], [0], [1], [0, 0, 1, 1], [], []>} : vector<8x128xbf16>, vector<128x128xbf16>, vector<8x128xf32> -> vector<8x128xf32>
    %c0_11 = arith.constant 0 : index
    %c0_12 = arith.constant 0 : index
    %14 = vector.load %arg5[%c0_11, %c0_12] : memref<1x128xf32, #tpu.memory_space<vmem>>, vector<1x128xf32>
    %15 = vector.broadcast %14 : vector<1x128xf32> to vector<8x128xf32>
    %16 = arith.addf %13, %15 : vector<8x128xf32>
    %17 = math.tanh %16 : vector<8x128xf32>
    %18 = arith.mulf %17, %17 : vector<8x128xf32>
    %cst_13 = arith.constant dense<0.000000e+00> : vector<8xf32>
    %19 = vector.multi_reduction <add>, %18, %cst_13 [1] : vector<8x128xf32> to vector<8xf32>
    %20 = vector.shape_cast %19 : vector<8xf32> to vector<8x1xf32>
    %cst_14 = arith.constant 1.000000e-24 : f32
    %21 = vector.broadcast %cst_14 : f32 to vector<8x1xf32>
    %22 = arith.maximumf %20, %21 : vector<8x1xf32>
    %23 = math.rsqrt %22 : vector<8x1xf32>
    %24 = vector.broadcast %23 : vector<8x1xf32> to vector<8x128xf32>
    %25 = arith.mulf %17, %24 : vector<8x128xf32>
    %c0_15 = arith.constant 0 : index
    %c0_16 = arith.constant 0 : index
    %26 = vector.load %arg6[%c0_15, %c0_16] : memref<8x128xf32, #tpu.memory_space<vmem>>, vector<8x128xf32>
    tpu.vector_store %arg6[%c0_15, %c0_16], %25 {strides = array<i32>} : memref<8x128xf32, #tpu.memory_space<vmem>>, vector<8x128xf32>,
    return
  }
  func.func @transform_0(%arg0: i32) -> (i32, i32, i32) {
    %c0_i32 = arith.constant 0 : i32
    %c0_i32_0 = arith.constant 0 : i32
    %c0_i32_1 = arith.constant 0 : i32
    return %arg0, %c0_i32, %c0_i32_0 : i32, i32, i32
  }
  func.func @transform_1(%arg0: i32) -> (i32, i32) {
    %c0_i32 = arith.constant 0 : i32
    %c0_i32_0 = arith.constant 0 : i32
    %c0_i32_1 = arith.constant 0 : i32
    return %c0_i32, %c0_i32_0 : i32, i32
  }
  func.func @transform_2(%arg0: i32) -> (i32, i32) {
    %c0_i32 = arith.constant 0 : i32
    %c0_i32_0 = arith.constant 0 : i32
    %c0_i32_1 = arith.constant 0 : i32
    return %c0_i32, %c0_i32_0 : i32, i32
  }
  func.func @transform_3(%arg0: i32) -> (i32, i32) {
    %c0_i32 = arith.constant 0 : i32
    %c0_i32_0 = arith.constant 0 : i32
    %c0_i32_1 = arith.constant 0 : i32
    return %c0_i32, %c0_i32_0 : i32, i32
  }
  func.func @transform_4(%arg0: i32) -> (i32, i32) {
    %c0_i32 = arith.constant 0 : i32
    %c0_i32_0 = arith.constant 0 : i32
    %c0_i32_1 = arith.constant 0 : i32
    return %c0_i32, %c0_i32_0 : i32, i32
  }
  func.func @transform_5(%arg0: i32) -> (i32, i32) {
    %c0_i32 = arith.constant 0 : i32
    %c0_i32_0 = arith.constant 0 : i32
    return %arg0, %c0_i32 : i32, i32
  }
}

</mosaic_0001>

<llo_original>
// kernel: image_embedding_forward.1
$region0: #{image_embedding_forward.1}
  #allocation0 [shape = 'u32[]', space=smem, size = 0x4, offset = 0x4, fixed_abs, tag = 'smem constant byte address 0x4 - core index']
  #allocation1 [shape = 'u32[72,128]{1,0:T(1,128)}', space=vmem, size = 0x9000, scoped, tag = 'internal scratch']
  %s0 = inlined_call_operand.vmem [shape: bf16[8,4,256], index: 0, kind: input, shape index: {}]
  %s1 = inlined_call_operand.vmem [shape: bf16[256,128], index: 1, kind: input, shape index: {}]
  %s2 = inlined_call_operand.vmem [shape: f32[1,128], index: 2, kind: input, shape index: {}]
  %s3 = inlined_call_operand.vmem [shape: bf16[128,128], index: 3, kind: input, shape index: {}]
  %s4 = inlined_call_operand.vmem [shape: f32[1,128], index: 4, kind: input, shape index: {}]
  %s5 = inlined_call_operand.vmem [shape: f32[8,128], index: 5, kind: output, shape index: {}]
  %s6 = sld [smem:[#allocation0]]
  $region30: #{image_embedding_forward.1} parent=0
    _
  %s8 = ssub.s32 1, %s6
  %s9 = scalar_select 0, %s8, %s6
  // Predicated region
  $region2: #{image_embedding_forward.1} parent=0 // pred_check
    _
  $region3: #{image_embedding_forward.1} parent=0 // pred_check_branch
    %11 = sbr.rel (0) target = $region5
  $region4: #{image_embedding_forward.1} parent=0 // pred_region
    _
  $region5: #{image_embedding_forward.1} parent=0 // pred_fallthru
    _
  // Predicated region
  $region6: #{image_embedding_forward.1} parent=0 // pred_check
    _
  $region7: #{image_embedding_forward.1} parent=0 // pred_check_branch
    %13 = sbr.rel (0) target = $region9
  $region8: #{image_embedding_forward.1} parent=0 // pred_region
    _
  $region9: #{image_embedding_forward.1} parent=0 // pred_fallthru
    _
  // Predicated region
  $region10: #{image_embedding_forward.1} parent=0 // pred_check
    _
  $region11: #{image_embedding_forward.1} parent=0 // pred_check_branch
    %15 = sbr.rel (0) target = $region13
  $region12: #{image_embedding_forward.1} parent=0 // pred_region
    _
  $region13: #{image_embedding_forward.1} parent=0 // pred_fallthru
    _
  // Predicated region
  $region14: #{image_embedding_forward.1} parent=0 // pred_check
    _
  $region15: #{image_embedding_forward.1} parent=0 // pred_check_branch
    %17 = sbr.rel (0) target = $region17
  $region16: #{image_embedding_forward.1} parent=0 // pred_region
    _
  $region17: #{image_embedding_forward.1} parent=0 // pred_fallthru
    _
  // Predicated region
  $region18: #{image_embedding_forward.1} parent=0 // pred_check
    _
  $region19: #{image_embedding_forward.1} parent=0 // pred_check_branch
    %19 = sbr.rel (0) target = $region21
  $region20: #{image_embedding_forward.1} parent=0 // pred_region
    _
  $region21: #{image_embedding_forward.1} parent=0 // pred_fallthru
    _
  %v20 = vld [vmem:[%s0] sm:$0xf]
  %v21 = vld [vmem:[%s0 + $0x4] sm:$0xf]
  %v22 = vld [vmem:[%s0 + $0x8] sm:$0xf]
  %v23 = vld [vmem:[%s0 + $0xc] sm:$0xf]
  %v24 = vld [vmem:[%s0 + $0x10] sm:$0xf]
  %v25 = vld [vmem:[%s0 + $0x14] sm:$0xf]
  %v26 = vld [vmem:[%s0 + $0x18] sm:$0xf]
  %v27 = vld [vmem:[%s0 + $0x1c] sm:$0xf]
  %v28 = vunpack.c.l.bf16 %v20
  %v29 = vunpack.c.l.bf16 %v21
  %v30 = vunpack.c.l.bf16 %v22
  %v31 = vunpack.c.l.bf16 %v23
  %v32 = vunpack.c.l.bf16 %v24
  %v33 = vunpack.c.l.bf16 %v25
  %v34 = vunpack.c.l.bf16 %v26
  %v35 = vunpack.c.l.bf16 %v27
  %44 = vst [vmem:[#allocation1] ss:$2 sm:$0xff] %v28
  %v45 = vld.sshfl [vmem:[#allocation1] sm:$0xff pattern:$0x75316420]
  %v46 = vld.sshfl [vmem:[#allocation1 + $0x8] sm:$0xff pattern:$0x75316420]
  %s47 = scalar_lea.vmem [#allocation1], 16
  %48 = vst [vmem:[%s47] ss:$2 sm:$0xff] %v29
  %v49 = vld.sshfl [vmem:[#allocation1 + $0x10] sm:$0xff pattern:$0x75316420]
  %v50 = vld.sshfl [vmem:[#allocation1 + $0x18] sm:$0xff pattern:$0x75316420]
  %s51 = scalar_lea.vmem [#allocation1], 32
  %52 = vst [vmem:[%s51] ss:$2 sm:$0xff] %v30
  %v53 = vld.sshfl [vmem:[#allocation1 + $0x20] sm:$0xff pattern:$0x75316420]
  %v54 = vld.sshfl [vmem:[#allocation1 + $0x28] sm:$0xff pattern:$0x75316420]
  %s55 = scalar_lea.vmem [#allocation1], 48
  %56 = vst [vmem:[%s55] ss:$2 sm:$0xff] %v31
  %v57 = vld.sshfl [vmem:[#allocation1 + $0x30] sm:$0xff pattern:$0x75316420]
  %v58 = vld.sshfl [vmem:[#allocation1 + $0x38] sm:$0xff pattern:$0x75316420]
  %59 = vst [vmem:[#allocation1] ss:$2 sm:$0xff] %v32
  %v60 = vld.sshfl [vmem:[#allocation1] sm:$0xff pattern:$0x75316420]
  %v61 = vld.sshfl [vmem:[#allocation1 + $0x8] sm:$0xff pattern:$0x75316420]
  %62 = vst [vmem:[%s47] ss:$2 sm:$0xff] %v33
  %v63 = vld.sshfl [vmem:[#allocation1 + $0x10] sm:$0xff pattern:$0x75316420]
  %v64 = vld.sshfl [vmem:[#allocation1 + $0x18] sm:$0xff pattern:$0x75316420]
  %65 = vst [vmem:[%s51] ss:$2 sm:$0xff] %v34
  %v66 = vld.sshfl [vmem:[#allocation1 + $0x20] sm:$0xff pattern:$0x75316420]
  %v67 = vld.sshfl [vmem:[#allocation1 + $0x28] sm:$0xff pattern:$0x75316420]
  %68 = vst [vmem:[%s55] ss:$2 sm:$0xff] %v35
  %v69 = vld.sshfl [vmem:[#allocation1 + $0x30] sm:$0xff pattern:$0x75316420]
  %v70 = vld.sshfl [vmem:[#allocation1 + $0x38] sm:$0xff pattern:$0x75316420]
  %vm87 = vcmask 1043456
  %v88 = vsel %vm87, %v45, 0.0
  %v89 = vrot.slane %v88, 4
  %v90 = vadd.f32 %v88, %v89
  %v91 = vrot.slane %v90, 2
  %v92 = vadd.f32 %v90, %v91
  %v93 = vrot.slane %v92, 1
  %v94 = vadd.f32 %v92, %v93
  %v95 = vsel %vm87, %v46, 0.0
  %v96 = vrot.slane %v95, 4
  %v97 = vadd.f32 %v95, %v96
  %v98 = vrot.slane %v97, 2
  %v99 = vadd.f32 %v97, %v98
  %v100 = vrot.slane %v99, 1
  %v101 = vadd.f32 %v99, %v100
  %v102 = vsel %vm87, %v49, 0.0
  %v103 = vrot.slane %v102, 4
  %v104 = vadd.f32 %v102, %v103
  %v105 = vrot.slane %v104, 2
  %v106 = vadd.f32 %v104, %v105
  %v107 = vrot.slane %v106, 1
  %v108 = vadd.f32 %v106, %v107
  %v109 = vsel %vm87, %v50, 0.0
  %v110 = vrot.slane %v109, 4
  %v111 = vadd.f32 %v109, %v110
  %v112 = vrot.slane %v111, 2
  %v113 = vadd.f32 %v111, %v112
  %v114 = vrot.slane %v113, 1
  %v115 = vadd.f32 %v113, %v114
  %v116 = vsel %vm87, %v53, 0.0
  %v117 = vrot.slane %v116, 4
  %v118 = vadd.f32 %v116, %v117
  %v119 = vrot.slane %v118, 2
  %v120 = vadd.f32 %v118, %v119
  %v121 = vrot.slane %v120, 1
  %v122 = vadd.f32 %v120, %v121
  %v123 = vsel %vm87, %v54, 0.0
  %v124 = vrot.slane %v123, 4
  %v125 = vadd.f32 %v123, %v124
  %v126 = vrot.slane %v125, 2
  %v127 = vadd.f32 %v125, %v126
  %v128 = vrot.slane %v127, 1
  %v129 = vadd.f32 %v127, %v128
  %v130 = vsel %vm87, %v57, 0.0
  %v131 = vrot.slane %v130, 4
  %v132 = vadd.f32 %v130, %v131
  %v133 = vrot.slane %v132, 2
  %v134 = vadd.f32 %v132, %v133
  %v135 = vrot.slane %v134, 1
  %v136 = vadd.f32 %v134, %v135
  %v137 = vsel %vm87, %v58, 0.0
  %v138 = vrot.slane %v137, 4
  %v139 = vadd.f32 %v137, %v138
  %v140 = vrot.slane %v139, 2
  %v141 = vadd.f32 %v139, %v140
  %v142 = vrot.slane %v141, 1
  %v143 = vadd.f32 %v141, %v142
  %v144 = vsel %vm87, %v60, 0.0
  %v145 = vrot.slane %v144, 4
  %v146 = vadd.f32 %v144, %v145
  %v147 = vrot.slane %v146, 2
  %v148 = vadd.f32 %v146, %v147
  %v149 = vrot.slane %v148, 1
  %v150 = vadd.f32 %v148, %v149
  %v151 = vsel %vm87, %v61, 0.0
  %v152 = vrot.slane %v151, 4
  %v153 = vadd.f32 %v151, %v152
  %v154 = vrot.slane %v153, 2
  %v155 = vadd.f32 %v153, %v154
  %v156 = vrot.slane %v155, 1
  %v157 = vadd.f32 %v155, %v156
  %v158 = vsel %vm87, %v63, 0.0
  %v159 = vrot.slane %v158, 4
  %v160 = vadd.f32 %v158, %v159
  %v161 = vrot.slane %v160, 2
  %v162 = vadd.f32 %v160, %v161
  %v163 = vrot.slane %v162, 1
  %v164 = vadd.f32 %v162, %v163
  %v165 = vsel %vm87, %v64, 0.0
  %v166 = vrot.slane %v165, 4
  %v167 = vadd.f32 %v165, %v166
  %v168 = vrot.slane %v167, 2
  %v169 = vadd.f32 %v167, %v168
  %v170 = vrot.slane %v169, 1
  %v171 = vadd.f32 %v169, %v170
  %v172 = vsel %vm87, %v66, 0.0
  %v173 = vrot.slane %v172, 4
  %v174 = vadd.f32 %v172, %v173
  %v175 = vrot.slane %v174, 2
  %v176 = vadd.f32 %v174, %v175
  %v177 = vrot.slane %v176, 1
  %v178 = vadd.f32 %v176, %v177
  %v179 = vsel %vm87, %v67, 0.0
  %v180 = vrot.slane %v179, 4
  %v181 = vadd.f32 %v179, %v180
  %v182 = vrot.slane %v181, 2
  %v183 = vadd.f32 %v181, %v182
  %v184 = vrot.slane %v183, 1
  %v185 = vadd.f32 %v183, %v184
  %v186 = vsel %vm87, %v69, 0.0
  %v187 = vrot.slane %v186, 4
  %v188 = vadd.f32 %v186, %v187
  %v189 = vrot.slane %v188, 2
  %v190 = vadd.f32 %v188, %v189
  %v191 = vrot.slane %v190, 1
  %v192 = vadd.f32 %v190, %v191
  %v193 = vsel %vm87, %v70, 0.0
  %v194 = vrot.slane %v193, 4
  %v195 = vadd.f32 %v193, %v194
  %v196 = vrot.slane %v195, 2
  %v197 = vadd.f32 %v195, %v196
  %v198 = vrot.slane %v197, 1
  %v199 = vadd.f32 %v197, %v198
  %v200 = vrcp.pop 4.0
  %v201 = vmul.f32 4.0, %v200
  %v202 = vsub.f32 1.0, %v201
  %v203 = vmul.f32 %v200, %v202
  %v204 = vadd.f32 %v200, %v203
  %vm205 = vweird.f32 %v200
  %v206 = vsel %vm205, %v200, %v204
  %v207 = vmul.f32 %v94, %v206
  %v208 = vmul.f32 %v101, %v206
  %v209 = vmul.f32 %v108, %v206
  %v210 = vmul.f32 %v115, %v206
  %v211 = vmul.f32 %v122, %v206
  %v212 = vmul.f32 %v129, %v206
  %v213 = vmul.f32 %v136, %v206
  %v214 = vmul.f32 %v143, %v206
  %v215 = vmul.f32 %v150, %v206
  %v216 = vmul.f32 %v157, %v206
  %v217 = vmul.f32 %v164, %v206
  %v218 = vmul.f32 %v171, %v206
  %v219 = vmul.f32 %v178, %v206
  %v220 = vmul.f32 %v185, %v206
  %v221 = vmul.f32 %v192, %v206
  %v222 = vmul.f32 %v199, %v206
  %v223 = vpack.c.bf16 %v207, %v207
  %v224 = vpack.c.bf16 %v208, %v208
  %v225 = vpack.c.bf16 %v209, %v209
  %v226 = vpack.c.bf16 %v210, %v210
  %v227 = vpack.c.bf16 %v211, %v211
  %v228 = vpack.c.bf16 %v212, %v212
  %v229 = vpack.c.bf16 %v213, %v213
  %v230 = vpack.c.bf16 %v214, %v214
  %v231 = vpack.c.bf16 %v215, %v215
  %v232 = vpack.c.bf16 %v216, %v216
  %v233 = vpack.c.bf16 %v217, %v217
  %v234 = vpack.c.bf16 %v218, %v218
  %v235 = vpack.c.bf16 %v219, %v219
  %v236 = vpack.c.bf16 %v220, %v220
  %v237 = vpack.c.bf16 %v221, %v221
  %v238 = vpack.c.bf16 %v222, %v222
  %v239 = vld [vmem:[%s1] sm:$0xf]
  %v240 = vld [vmem:[%s1 + $0x4] sm:$0xf]
  %v241 = vld [vmem:[%s1 + $0x8] sm:$0xf]
  %v242 = vld [vmem:[%s1 + $0xc] sm:$0xf]
  %v243 = vld [vmem:[%s1 + $0x10] sm:$0xf]
  %v244 = vld [vmem:[%s1 + $0x14] sm:$0xf]
  %v245 = vld [vmem:[%s1 + $0x18] sm:$0xf]
  %v246 = vld [vmem:[%s1 + $0x1c] sm:$0xf]
  %v247 = vld [vmem:[%s1 + $0x20] sm:$0xf]
  %v248 = vld [vmem:[%s1 + $0x24] sm:$0xf]
  %v249 = vld [vmem:[%s1 + $0x28] sm:$0xf]
  %v250 = vld [vmem:[%s1 + $0x2c] sm:$0xf]
  %v251 = vld [vmem:[%s1 + $0x30] sm:$0xf]
  %v252 = vld [vmem:[%s1 + $0x34] sm:$0xf]
  %v253 = vld [vmem:[%s1 + $0x38] sm:$0xf]
  %v254 = vld [vmem:[%s1 + $0x3c] sm:$0xf]
  %v255 = vld [vmem:[%s1 + $0x40] sm:$0xf]
  %v256 = vld [vmem:[%s1 + $0x44] sm:$0xf]
  %v257 = vld [vmem:[%s1 + $0x48] sm:$0xf]
  %v258 = vld [vmem:[%s1 + $0x4c] sm:$0xf]
  %v259 = vld [vmem:[%s1 + $0x50] sm:$0xf]
  %v260 = vld [vmem:[%s1 + $0x54] sm:$0xf]
  %v261 = vld [vmem:[%s1 + $0x58] sm:$0xf]
  %v262 = vld [vmem:[%s1 + $0x5c] sm:$0xf]
  %v263 = vld [vmem:[%s1 + $0x60] sm:$0xf]
  %v264 = vld [vmem:[%s1 + $0x64] sm:$0xf]
  %v265 = vld [vmem:[%s1 + $0x68] sm:$0xf]
  %v266 = vld [vmem:[%s1 + $0x6c] sm:$0xf]
  %v267 = vld [vmem:[%s1 + $0x70] sm:$0xf]
  %v268 = vld [vmem:[%s1 + $0x74] sm:$0xf]
  %v269 = vld [vmem:[%s1 + $0x78] sm:$0xf]
  %v270 = vld [vmem:[%s1 + $0x7c] sm:$0xf]
  %v271 = vld [vmem:[%s2] sm:$0x1]
  %v273 = vperm.slane %v271, 0
  %v291 = vunpack.c.l.b16 %v223
  %v292 = vunpack.c.l.b16 %v224
  %v293 = vunpack.c.l.b16 %v225
  %v294 = vunpack.c.l.b16 %v226
  %v295 = vunpack.c.l.b16 %v227
  %v296 = vunpack.c.l.b16 %v228
  %v297 = vunpack.c.l.b16 %v229
  %v298 = vunpack.c.l.b16 %v230
  %v299 = vunpack.c.l.b16 %v231
  %v300 = vunpack.c.l.b16 %v232
  %v301 = vunpack.c.l.b16 %v233
  %v302 = vunpack.c.l.b16 %v234
  %v303 = vunpack.c.l.b16 %v235
  %v304 = vunpack.c.l.b16 %v236
  %v305 = vunpack.c.l.b16 %v237
  %v306 = vunpack.c.l.b16 %v238
  %vm307 = vcmask 1041409
  %v308 = vsel %vm307, %v293, %v291
  %vm309 = vcmask 1042434
  %v310 = vsel %vm309, %v295, %v308
  %vm311 = vcmask 1043459
  %v312 = vsel %vm311, %v297, %v310
  %vm313 = vcmask 1044484
  %v314 = vsel %vm313, %v299, %v312
  %vm315 = vcmask 1045509
  %v316 = vsel %vm315, %v301, %v314
  %vm317 = vcmask 1046534
  %v318 = vsel %vm317, %v303, %v316
  %vm319 = vcmask 1047559
  %v320 = vsel %vm319, %v305, %v318
  %v321 = vsel %vm307, %v294, %v292
  %v322 = vsel %vm309, %v296, %v321
  %v323 = vsel %vm311, %v298, %v322
  %v324 = vsel %vm313, %v300, %v323
  %v325 = vsel %vm315, %v302, %v324
  %v326 = vsel %vm317, %v304, %v325
  %v327 = vsel %vm319, %v306, %v326
  %v328 = vpack.c.b16 %v320, %v320
  %v329 = vpack.c.b16 %v327, %v327
  %v364 = vunpack.c.l.b16 %v239
  %v365 = vunpack.c.l.b16 %v240
  %v366 = vunpack.c.l.b16 %v241
  %v367 = vunpack.c.l.b16 %v242
  %v368 = vunpack.c.l.b16 %v243
  %v369 = vunpack.c.l.b16 %v244
  %v370 = vunpack.c.l.b16 %v245
  %v371 = vunpack.c.l.b16 %v246
  %v372 = vunpack.c.l.b16 %v247
  %v373 = vunpack.c.l.b16 %v248
  %v374 = vunpack.c.l.b16 %v249
  %v375 = vunpack.c.l.b16 %v250
  %v376 = vunpack.c.l.b16 %v251
  %v377 = vunpack.c.l.b16 %v252
  %v378 = vunpack.c.l.b16 %v253
  %v379 = vunpack.c.l.b16 %v254
  %v380 = vunpack.c.l.b16 %v255
  %v381 = vunpack.c.l.b16 %v256
  %v382 = vunpack.c.l.b16 %v257
  %v383 = vunpack.c.l.b16 %v258
  %v384 = vunpack.c.l.b16 %v259
  %v385 = vunpack.c.l.b16 %v260
  %v386 = vunpack.c.l.b16 %v261
  %v387 = vunpack.c.l.b16 %v262
  %v388 = vunpack.c.l.b16 %v263
  %v389 = vunpack.c.l.b16 %v264
  %v390 = vunpack.c.l.b16 %v265
  %v391 = vunpack.c.l.b16 %v266
  %v392 = vunpack.c.l.b16 %v267
  %v393 = vunpack.c.l.b16 %v268
  %v394 = vunpack.c.l.b16 %v269
  %v395 = vunpack.c.l.b16 %v270
  %v396 = vpack.c.b16 %v365, %v364
  %v397 = vpack.c.b16 %v367, %v366
  %v398 = vpack.c.b16 %v369, %v368
  %v399 = vpack.c.b16 %v371, %v370
  %v400 = vpack.c.b16 %v373, %v372
  %v401 = vpack.c.b16 %v375, %v374
  %v402 = vpack.c.b16 %v377, %v376
  %v403 = vpack.c.b16 %v379, %v378
  %v404 = vpack.c.b16 %v381, %v380
  %v405 = vpack.c.b16 %v383, %v382
  %v406 = vpack.c.b16 %v385, %v384
  %v407 = vpack.c.b16 %v387, %v386
  %v408 = vpack.c.b16 %v389, %v388
  %v409 = vpack.c.b16 %v391, %v390
  %v410 = vpack.c.b16 %v393, %v392
  %v411 = vpack.c.b16 %v395, %v394
  %428 = vmatpush.bf16.msra.mxu0 %v403
  %429 = vmatpush.bf16.msra.mxu0 %v402
  %430 = vmatpush.bf16.msra.mxu0 %v401
  %431 = vmatpush.bf16.msra.mxu0 %v400
  %432 = vmatpush.bf16.msra.mxu0 %v399
  %433 = vmatpush.bf16.msra.mxu0 %v398
  %434 = vmatpush.bf16.msra.mxu0 %v397
  %435 = vmatpush.bf16.msra.mxu0 %v396
  %436 = vmatmul.bf16.gmra.mxu0 %v328
  %v437 = vpop.f32.mrf.mxu0
  %v438 = vadd.f32 %v273, %v437
  %v439 = vpop.f32.mrf.mxu0
  %440 = vdwg.mxu0
  %441 = vmatpush.bf16.msra.mxu0 %v411
  %442 = vmatpush.bf16.msra.mxu0 %v410
  %443 = vmatpush.bf16.msra.mxu0 %v409
  %444 = vmatpush.bf16.msra.mxu0 %v408
  %445 = vmatpush.bf16.msra.mxu0 %v407
  %446 = vmatpush.bf16.msra.mxu0 %v406
  %447 = vmatpush.bf16.msra.mxu0 %v405
  %448 = vmatpush.bf16.msra.mxu0 %v404
  %449 = vmatmul.bf16.gmra.mxu0 %v329
  %v450 = vpop.f32.mrf.mxu0
  %v451 = vadd.f32 %v438, %v450
  %v452 = vpop.f32.mrf.mxu0
  %453 = vdwg.mxu0
  %v454 = vpack.c.bf16 %v451, %v451
  %v455 = vld [vmem:[%s3] sm:$0xf]
  %v456 = vld [vmem:[%s3 + $0x4] sm:$0xf]
  %v457 = vld [vmem:[%s3 + $0x8] sm:$0xf]
  %v458 = vld [vmem:[%s3 + $0xc] sm:$0xf]
  %v459 = vld [vmem:[%s3 + $0x10] sm:$0xf]
  %v460 = vld [vmem:[%s3 + $0x14] sm:$0xf]
  %v461 = vld [vmem:[%s3 + $0x18] sm:$0xf]
  %v462 = vld [vmem:[%s3 + $0x1c] sm:$0xf]
  %v463 = vld [vmem:[%s3 + $0x20] sm:$0xf]
  %v464 = vld [vmem:[%s3 + $0x24] sm:$0xf]
  %v465 = vld [vmem:[%s3 + $0x28] sm:$0xf]
  %v466 = vld [vmem:[%s3 + $0x2c] sm:$0xf]
  %v467 = vld [vmem:[%s3 + $0x30] sm:$0xf]
  %v468 = vld [vmem:[%s3 + $0x34] sm:$0xf]
  %v469 = vld [vmem:[%s3 + $0x38] sm:$0xf]
  %v470 = vld [vmem:[%s3 + $0x3c] sm:$0xf]
  %v471 = vld [vmem:[%s4] sm:$0x1]
  %v473 = vperm.slane %v471, 0
  %v491 = vunpack.c.l.b16 %v455
  %v492 = vunpack.c.l.b16 %v456
  %v493 = vunpack.c.l.b16 %v457
  %v494 = vunpack.c.l.b16 %v458
  %v495 = vunpack.c.l.b16 %v459
  %v496 = vunpack.c.l.b16 %v460
  %v497 = vunpack.c.l.b16 %v461
  %v498 = vunpack.c.l.b16 %v462
  %v499 = vunpack.c.l.b16 %v463
  %v500 = vunpack.c.l.b16 %v464
  %v501 = vunpack.c.l.b16 %v465
  %v502 = vunpack.c.l.b16 %v466
  %v503 = vunpack.c.l.b16 %v467
  %v504 = vunpack.c.l.b16 %v468
  %v505 = vunpack.c.l.b16 %v469
  %v506 = vunpack.c.l.b16 %v470
  %v507 = vpack.c.b16 %v492, %v491
  %v508 = vpack.c.b16 %v494, %v493
  %v509 = vpack.c.b16 %v496, %v495
  %v510 = vpack.c.b16 %v498, %v497
  %v511 = vpack.c.b16 %v500, %v499
  %v512 = vpack.c.b16 %v502, %v501
  %v513 = vpack.c.b16 %v504, %v503
  %v514 = vpack.c.b16 %v506, %v505
  %523 = vmatpush.bf16.msra.mxu0 %v514
  %524 = vmatpush.bf16.msra.mxu0 %v513
  %525 = vmatpush.bf16.msra.mxu0 %v512
  %526 = vmatpush.bf16.msra.mxu0 %v511
  %527 = vmatpush.bf16.msra.mxu0 %v510
  %528 = vmatpush.bf16.msra.mxu0 %v509
  %529 = vmatpush.bf16.msra.mxu0 %v508
  %530 = vmatpush.bf16.msra.mxu0 %v507
  %531 = vmatmul.bf16.gmra.mxu0 %v454
  %v532 = vpop.f32.mrf.mxu0
  %v533 = vadd.f32 %v473, %v532
  %v534 = vpop.f32.mrf.mxu0
  %535 = vdwg.mxu0
  %v536 = vtanh.pop %v533
  %v537 = vmul.f32 %v536, %v536
  %538 = vadd.xlane.f32.xlu0 %v537
  %v539 = vpop.xlane.xlu0 %538
  %v540 = vmax.f32 %v539, 1e-24
  %v541 = vrsqrt.pop %v540
  %v542 = vmul.f32 %v541, %v540
  %v543 = vmul.f32 %v542, %v541
  %v544 = vmul.f32 0.5, %v543
  %v545 = vsub.f32 1.5, %v544
  %v546 = vmul.f32 %v541, %v545
  %vm547 = vweird.f32 %v540
  %vm548 = vweird.f32 %v541
  %vm549 = vmor %vm547, %vm548
  %v550 = vsel %vm549, %v541, %v546
  %v551 = vmul.f32 %v536, %v550
  %552 = vst [vmem:[%s5] sm:$0xff] %v551
  // Predicated region
  $region22: #{image_embedding_forward.1} parent=0 // pred_check
    _
  $region23: #{image_embedding_forward.1} parent=0 // pred_check_branch
    %554 = sbr.rel (0) target = $region25
  $region24: #{image_embedding_forward.1} parent=0 // pred_region
    _
  $region25: #{image_embedding_forward.1} parent=0 // pred_fallthru
    _
  // Predicated region
  $region26: #{image_embedding_forward.1} parent=0 // pred_check
    _
  $region27: #{image_embedding_forward.1} parent=0 // pred_check_branch
    %556 = sbr.rel (0) target = $region29
  $region28: #{image_embedding_forward.1} parent=0 // pred_region
    _
  $region29: #{image_embedding_forward.1} parent=0 // pred_fallthru
    _

</llo_original>
